<compile_context>
chip_gen: v7x
topology: tpu7x:2x2x1
jax: 0.10.0
libtpu: 0.0.40
codegen_flags: <defaults>
</compile_context>

<pallas_src>
import jax
import jax.numpy as jnp
from jax.experimental import pallas as pl
from jax.experimental.pallas import tpu as pltpu

_CHUNK = 8  # hidden-state rows buffered in registers between VMEM flushes


def _lstm_decode_kernel(sent_ref,    # SMEM (SP,) int32   scalar-prefetched token ids
                        table_ref,   # VMEM (V, 4H) f32   fused x-projection table
                        whh_ref,     # VMEM (H, 4H) bf16  recurrent weights (i,f,o,g)
                        wdec_ref,    # VMEM (H, TP) bf16  decoder weight (padded)
                        bdec_ref,    # VMEM (1, TP) f32   decoder bias (-1e30 in pad lanes)
                        scores_ref,  # out  (SP, TP) f32  log-probabilities
                        hbuf_ref):   # VMEM (SP, H) f32   all hidden states
    SP = hbuf_ref.shape[0]
    H = whh_ref.shape[0]

    # Tiny at H=32 -> keep resident in vregs.  (For large H, keep it in VMEM.)
    whh = whh_ref[...]                                              # (H, 4H) bf16

    row_ids = jax.lax.broadcasted_iota(jnp.int32, (_CHUNK, H), 0)   # hoisted

    def step(t, carry):
        h, c, tile = carry                                          # (1,H),(1,H),(CHUNK,H) f32

        # Gather this step's precomputed x-projection row (off the h-chain).
        xrow = table_ref[pl.ds(sent_ref[t], 1), :]                  # (1, 4H) f32

        # Serial part: h @ W_hh^T on the MXU, bf16 operands, f32 accumulation.
        gates = xrow + jnp.dot(h.astype(jnp.bfloat16), whh,
                               preferred_element_type=jnp.float32)  # (1, 4H) f32

        # Gate order is (i, f, o, g): one sigmoid over 3H lanes, one tanh over H.
        sig = jax.nn.sigmoid(gates[:, : 3 * H])
        g_g = jnp.tanh(gates[:, 3 * H:])
        i_g = sig[:, 0:H]
        f_g = sig[:, H:2 * H]
        o_g = sig[:, 2 * H:3 * H]

        c_new = f_g * c + i_g * g_g
        h_new = o_g * jnp.tanh(c_new)

        # Accumulate h rows in a register tile; flush to VMEM once per _CHUNK.
        row = jax.lax.rem(t, _CHUNK)
        tile = jnp.where(row_ids == row, h_new, tile)

        @pl.when(row == _CHUNK - 1)
        def _():
            base = pl.multiple_of(t - (_CHUNK - 1), _CHUNK)
            hbuf_ref[pl.ds(base, _CHUNK), :] = tile

        return (h_new, c_new, tile)

    h0 = jnp.zeros((1, H), jnp.float32)
    c0 = jnp.zeros((1, H), jnp.float32)
    tile0 = jnp.zeros((_CHUNK, H), jnp.float32)
    unroll_amt = SP if SP <= 64 else _CHUNK      # cap unroll for long sequences
    jax.lax.fori_loop(0, SP, step, (h0, c0, tile0), unroll=unroll_amt)

    # Batched decoder (bf16 MXU) + row-wise log_softmax, one dense (SP, TP) store.
    h_all = hbuf_ref[...].astype(jnp.bfloat16)                      # (SP, H)
    logits = jnp.dot(h_all, wdec_ref[...],
                     preferred_element_type=jnp.float32) + bdec_ref[...]
    m = jnp.max(logits, axis=-1, keepdims=True)
    z = logits - m
    lse = jnp.log(jnp.sum(jnp.exp(z), axis=-1, keepdims=True))
    scores_ref[...] = z - lse


def lstm_model_forward(sentence, params):
    """Forward pass of LSTMModel. sentence: int32 (S,). Returns (S, target_size) log-probs."""
    emb_table = params["embedding"]          # (V, E)
    w_ih = params["w_ih"]                    # (4H, E)  gate order i,f,g,o (PyTorch)
    w_hh = params["w_hh"]                    # (4H, H)
    b_ih = params["b_ih"]                    # (4H,)
    b_hh = params["b_hh"]                    # (4H,)
    w_dec = params["w_dec"]                  # (T, H)
    b_dec = params["b_dec"]                  # (T,)

    S = sentence.shape[0]
    V, _E = emb_table.shape
    H = w_hh.shape[1]
    T = w_dec.shape[0]

    SP = ((S + _CHUNK - 1) // _CHUNK) * _CHUNK      # pad time dim (extra steps discarded)
    TP = ((T + 127) // 128) * 128                   # lane-dense class dim

    # Reorder gates (i,f,g,o) -> (i,f,o,g) so sigmoid gates are contiguous.
    perm = jnp.concatenate([jnp.arange(0, 2 * H),
                            jnp.arange(3 * H, 4 * H),
                            jnp.arange(2 * H, 3 * H)])
    w_ih_r = jnp.asarray(w_ih, jnp.float32)[perm]                   # (4H, E)
    w_hh_r = jnp.asarray(w_hh, jnp.float32)[perm]                   # (4H, H)
    bias_r = (jnp.asarray(b_ih, jnp.float32)
              + jnp.asarray(b_hh, jnp.float32))[perm]               # (4H,)

    # Fused embedding + input projection + bias table, gathered in-kernel.
    fused_table = jnp.dot(emb_table.astype(jnp.float32), w_ih_r.T) + bias_r[None, :]

    whh_t = w_hh_r.T.astype(jnp.bfloat16)                           # (H, 4H) bf16

    # Decoder: transpose, pad class dim to TP; pad bias lanes get -1e30 so the
    # in-kernel log_softmax ignores them.
    wdec_t = jnp.zeros((H, TP), jnp.bfloat16).at[:, :T].set(
        jnp.asarray(w_dec, jnp.float32).T.astype(jnp.bfloat16))
    bdec_p = jnp.full((1, TP), -1e30, jnp.float32).at[0, :T].set(
        jnp.asarray(b_dec, jnp.float32))

    sent_p = jnp.zeros((SP,), jnp.int32).at[:S].set(sentence.astype(jnp.int32))

    scores_p = pl.pallas_call(
        _lstm_decode_kernel,
        out_shape=jax.ShapeDtypeStruct((SP, TP), jnp.float32),
        grid_spec=pltpu.PrefetchScalarGridSpec(
            num_scalar_prefetch=1,                   # token ids -> SMEM
            grid=(1,),                               # whole sequence in one invocation
            in_specs=[
                pl.BlockSpec((V, 4 * H), lambda i, s: (0, 0)),   # fused table
                pl.BlockSpec((H, 4 * H), lambda i, s: (0, 0)),   # W_hh^T (bf16)
                pl.BlockSpec((H, TP), lambda i, s: (0, 0)),      # decoder weight (bf16)
                pl.BlockSpec((1, TP), lambda i, s: (0, 0)),      # decoder bias
            ],
            out_specs=pl.BlockSpec((SP, TP), lambda i, s: (0, 0)),
            scratch_shapes=[
                pltpu.VMEM((SP, H), jnp.float32),    # all hidden states h_1..h_SP
            ],
        ),
        compiler_params=pltpu.CompilerParams(
            dimension_semantics=("arbitrary",),
        ),
    )(sent_p, fused_table, whh_t, wdec_t, bdec_p)

    return scores_p[:S, :T]


def _reference_forward(sentence, params):
    """Pure-JAX f32 reference (mirrors PyTorch semantics) for validation."""
    emb_table = params["embedding"]
    w_ih, w_hh = params["w_ih"], params["w_hh"]
    b_ih, b_hh = params["b_ih"], params["b_hh"]
    w_dec, b_dec = params["w_dec"], params["b_dec"]
    H = w_hh.shape[1]

    embeds = emb_table[sentence]

    def step(carry, x):
        h, c = carry
        gates = x @ w_ih.T + b_ih + h @ w_hh.T + b_hh
        i = jax.nn.sigmoid(gates[0:H])
        f = jax.nn.sigmoid(gates[H:2 * H])
        g = jnp.tanh(gates[2 * H:3 * H])
        o = jax.nn.sigmoid(gates[3 * H:4 * H])
        c_new = f * c + i * g
        h_new = o * jnp.tanh(c_new)
        return (h_new, c_new), h_new

    h0 = jnp.zeros((H,), jnp.float32)
    c0 = jnp.zeros((H,), jnp.float32)
    _, lstm_out = jax.lax.scan(step, (h0, c0), embeds)
    logits = lstm_out @ w_dec.T + b_dec
    return jax.nn.log_softmax(logits, axis=-1)


def _init_params(key, vocab_size, embedding_dim, hidden_dim, target_size):
    ks = jax.random.split(key, 8)
    bound = 1.0 / jnp.sqrt(hidden_dim)
    return {
        "embedding": jax.random.normal(ks[0], (vocab_size, embedding_dim), jnp.float32),
        "w_ih": jax.random.uniform(ks[1], (4 * hidden_dim, embedding_dim), jnp.float32, -bound, bound),
        "w_hh": jax.random.uniform(ks[2], (4 * hidden_dim, hidden_dim), jnp.float32, -bound, bound),
        "b_ih": jax.random.uniform(ks[3], (4 * hidden_dim,), jnp.float32, -bound, bound),
        "b_hh": jax.random.uniform(ks[4], (4 * hidden_dim,), jnp.float32, -bound, bound),
        "w_dec": jax.random.uniform(ks[5], (target_size, hidden_dim), jnp.float32, -bound, bound),
        "b_dec": jax.random.uniform(ks[6], (target_size,), jnp.float32, -bound, bound),
    }


if __name__ == "__main__":
    # Small shapes consistent with the module.
    vocab_size = 50
    embedding_dim = 16
    hidden_dim = 32
    target_size = 16
    seq_len = 8

    key = jax.random.PRNGKey(0)
    k_params, k_sent = jax.random.split(key)
    params = _init_params(k_params, vocab_size, embedding_dim, hidden_dim, target_size)
    sentence = jax.random.randint(k_sent, (seq_len,), 0, vocab_size, dtype=jnp.int32)

    forward = jax.jit(lstm_model_forward)
    scores = jax.block_until_ready(forward(sentence, params))

    ref = jax.block_until_ready(_reference_forward(sentence, params))
    assert scores.shape == (seq_len, target_size)
    # bf16 MXU operands (f32 accumulation) vs the all-f32 reference -> a few e-3
    # of divergence on the log-probs; tolerance loosened accordingly.
    assert jnp.allclose(scores, ref, atol=2e-2, rtol=2e-2), "mismatch vs reference"

    print("KERNEL_OK")
</pallas_src>

<mosaic_0001>
module attributes {stable_mosaic.version = 11 : i64} {
  func.func @_lstm_decode_kernel(%arg0: i32, %arg1: memref<8xi32, #tpu.memory_space<smem>>, %arg2: memref<50x128xf32, #tpu.memory_space<vmem>>, %arg3: memref<32x128xbf16, #tpu.memory_space<vmem>>, %arg4: memref<32x128xbf16, #tpu.memory_space<vmem>>, %arg5: memref<1x128xf32, #tpu.memory_space<vmem>>, %arg6: memref<8x128xf32, #tpu.memory_space<vmem>>, %arg7: memref<8x32xf32, #tpu.memory_space<vmem>>) attributes {dimension_semantics = [#tpu.dimension_semantics<arbitrary>], iteration_bounds = array<i64: 1>, scalar_prefetch = 1 : i64, scratch_operands = 1 : i64, tpu.core_type = #tpu.core_type<tc>, window_params = [{pipeline_mode = #tpu.pipeline_mode<synchronous>, transform_indices = @transform_0, window_bounds = array<i64: 50, 128>}, {pipeline_mode = #tpu.pipeline_mode<synchronous>, transform_indices = @transform_1, window_bounds = array<i64: 32, 128>}, {pipeline_mode = #tpu.pipeline_mode<synchronous>, transform_indices = @transform_2, window_bounds = array<i64: 32, 128>}, {pipeline_mode = #tpu.pipeline_mode<synchronous>, transform_indices = @transform_3, window_bounds = array<i64: 1, 128>}, {pipeline_mode = #tpu.pipeline_mode<synchronous>, transform_indices = @transform_4, window_bounds = array<i64: 8, 128>}]} {
    %c0 = arith.constant 0 : index
    %c0_0 = arith.constant 0 : index
    %0 = vector.load %arg3[%c0, %c0_0] : memref<32x128xbf16, #tpu.memory_space<vmem>>, vector<32x128xbf16>
    %1 = tpu.iota {dimensions = array<i32: 0>} : vector<8x32xi32>
    %cst = arith.constant 0.000000e+00 : f32
    %2 = vector.broadcast %cst : f32 to vector<1x32xf32>
    %cst_1 = arith.constant 0.000000e+00 : f32
    %3 = vector.broadcast %cst_1 : f32 to vector<1x32xf32>
    %cst_2 = arith.constant 0.000000e+00 : f32
    %4 = vector.broadcast %cst_2 : f32 to vector<8x32xf32>
    %c0_i32 = arith.constant 0 : i32
    %5 = arith.index_cast %c0_i32 : i32 to index
    %6 = memref.load %arg1[%5] : memref<8xi32, #tpu.memory_space<smem>>
    %7 = arith.index_cast %6 : i32 to index
    %c0_3 = arith.constant 0 : index
    %8 = vector.load %arg2[%7, %c0_3] : memref<50x128xf32, #tpu.memory_space<vmem>>, vector<1x128xf32>
    %9 = arith.truncf %2 : vector<1x32xf32> to vector<1x32xbf16>
    %cst_4 = arith.constant dense<0.000000e+00> : vector<1x128xf32>
    %10 = tpu.matmul %9, %0, %cst_4 {dimension_numbers = #tpu.dot_dimension_numbers<[1], [0], [0], [1], [0, 0, 1, 1], [], []>} : vector<1x32xbf16>, vector<32x128xbf16>, vector<1x128xf32> -> vector<1x128xf32>
    %11 = arith.addf %8, %10 : vector<1x128xf32>
    %12 = vector.extract_strided_slice %11 {offsets = [0, 0], sizes = [1, 96], strides = [1, 1]} : vector<1x128xf32> to vector<1x96xf32>
    %13 = arith.negf %12 : vector<1x96xf32>
    %14 = math.exp %13 : vector<1x96xf32>
    %cst_5 = arith.constant 1.000000e+00 : f32
    %15 = vector.broadcast %cst_5 : f32 to vector<1x96xf32>
    %16 = arith.addf %15, %14 : vector<1x96xf32>
    %17 = arith.divf %15, %16 : vector<1x96xf32>
    %18 = vector.extract_strided_slice %11 {offsets = [0, 96], sizes = [1, 32], strides = [1, 1]} : vector<1x128xf32> to vector<1x32xf32>
    %19 = math.tanh %18 : vector<1x32xf32>
    %20 = vector.extract_strided_slice %17 {offsets = [0, 0], sizes = [1, 32], strides = [1, 1]} : vector<1x96xf32> to vector<1x32xf32>
    %21 = vector.extract_strided_slice %17 {offsets = [0, 32], sizes = [1, 32], strides = [1, 1]} : vector<1x96xf32> to vector<1x32xf32>
    %22 = vector.extract_strided_slice %17 {offsets = [0, 64], sizes = [1, 32], strides = [1, 1]} : vector<1x96xf32> to vector<1x32xf32>
    %23 = arith.mulf %21, %3 : vector<1x32xf32>
    %24 = arith.mulf %20, %19 : vector<1x32xf32>
    %25 = arith.addf %23, %24 : vector<1x32xf32>
    %26 = math.tanh %25 : vector<1x32xf32>
    %27 = arith.mulf %22, %26 : vector<1x32xf32>
    %c8_i32 = arith.constant 8 : i32
    %28 = arith.remsi %c0_i32, %c8_i32 : i32
    %29 = vector.broadcast %28 : i32 to vector<8x32xi32>
    %30 = arith.cmpi eq, %1, %29 : vector<8x32xi32>
    %31 = vector.shape_cast %27 : vector<1x32xf32> to vector<1x32xf32>
    %32 = vector.broadcast %31 : vector<1x32xf32> to vector<8x32xf32>
    %33 = arith.select %30, %32, %4 : vector<8x32xi1>, vector<8x32xf32>
    %c7_i32 = arith.constant 7 : i32
    %34 = arith.cmpi eq, %28, %c7_i32 : i32
    %35 = arith.extui %34 : i1 to i32
    %c0_i32_6 = arith.constant 0 : i32
    %36 = arith.cmpi ne, %35, %c0_i32_6 : i32
    scf.if %36 {
      %c7_i32_62 = arith.constant 7 : i32
      %279 = arith.subi %c0_i32, %c7_i32_62 : i32
      %280 = tpu.assume_multiple %279, 8 : i32
      %281 = arith.index_cast %280 : i32 to index
      %c0_63 = arith.constant 0 : index
      %282 = vector.load %arg7[%281, %c0_63] : memref<8x32xf32, #tpu.memory_space<vmem>>, vector<8x32xf32>
      tpu.vector_store %arg7[%281, %c0_63], %33 {strides = array<i32>} : memref<8x32xf32, #tpu.memory_space<vmem>>, vector<8x32xf32>,
    } else {
    }
    %c1_i32 = arith.constant 1 : i32
    %37 = arith.index_cast %c1_i32 : i32 to index
    %38 = memref.load %arg1[%37] : memref<8xi32, #tpu.memory_space<smem>>
    %39 = arith.index_cast %38 : i32 to index
    %c0_7 = arith.constant 0 : index
    %40 = vector.load %arg2[%39, %c0_7] : memref<50x128xf32, #tpu.memory_space<vmem>>, vector<1x128xf32>
    %41 = arith.truncf %27 : vector<1x32xf32> to vector<1x32xbf16>
    %cst_8 = arith.constant dense<0.000000e+00> : vector<1x128xf32>
    %42 = tpu.matmul %41, %0, %cst_8 {dimension_numbers = #tpu.dot_dimension_numbers<[1], [0], [0], [1], [0, 0, 1, 1], [], []>} : vector<1x32xbf16>, vector<32x128xbf16>, vector<1x128xf32> -> vector<1x128xf32>
    %43 = arith.addf %40, %42 : vector<1x128xf32>
    %44 = vector.extract_strided_slice %43 {offsets = [0, 0], sizes = [1, 96], strides = [1, 1]} : vector<1x128xf32> to vector<1x96xf32>
    %45 = arith.negf %44 : vector<1x96xf32>
    %46 = math.exp %45 : vector<1x96xf32>
    %cst_9 = arith.constant 1.000000e+00 : f32
    %47 = vector.broadcast %cst_9 : f32 to vector<1x96xf32>
    %48 = arith.addf %47, %46 : vector<1x96xf32>
    %49 = arith.divf %47, %48 : vector<1x96xf32>
    %50 = vector.extract_strided_slice %43 {offsets = [0, 96], sizes = [1, 32], strides = [1, 1]} : vector<1x128xf32> to vector<1x32xf32>
    %51 = math.tanh %50 : vector<1x32xf32>
    %52 = vector.extract_strided_slice %49 {offsets = [0, 0], sizes = [1, 32], strides = [1, 1]} : vector<1x96xf32> to vector<1x32xf32>
    %53 = vector.extract_strided_slice %49 {offsets = [0, 32], sizes = [1, 32], strides = [1, 1]} : vector<1x96xf32> to vector<1x32xf32>
    %54 = vector.extract_strided_slice %49 {offsets = [0, 64], sizes = [1, 32], strides = [1, 1]} : vector<1x96xf32> to vector<1x32xf32>
    %55 = arith.mulf %53, %25 : vector<1x32xf32>
    %56 = arith.mulf %52, %51 : vector<1x32xf32>
    %57 = arith.addf %55, %56 : vector<1x32xf32>
    %58 = math.tanh %57 : vector<1x32xf32>
    %59 = arith.mulf %54, %58 : vector<1x32xf32>
    %c8_i32_10 = arith.constant 8 : i32
    %60 = arith.remsi %c1_i32, %c8_i32_10 : i32
    %61 = vector.broadcast %60 : i32 to vector<8x32xi32>
    %62 = arith.cmpi eq, %1, %61 : vector<8x32xi32>
    %63 = vector.shape_cast %59 : vector<1x32xf32> to vector<1x32xf32>
    %64 = vector.broadcast %63 : vector<1x32xf32> to vector<8x32xf32>
    %65 = arith.select %62, %64, %33 : vector<8x32xi1>, vector<8x32xf32>
    %c7_i32_11 = arith.constant 7 : i32
    %66 = arith.cmpi eq, %60, %c7_i32_11 : i32
    %67 = arith.extui %66 : i1 to i32
    %c0_i32_12 = arith.constant 0 : i32
    %68 = arith.cmpi ne, %67, %c0_i32_12 : i32
    scf.if %68 {
      %c7_i32_62 = arith.constant 7 : i32
      %279 = arith.subi %c1_i32, %c7_i32_62 : i32
      %280 = tpu.assume_multiple %279, 8 : i32
      %281 = arith.index_cast %280 : i32 to index
      %c0_63 = arith.constant 0 : index
      %282 = vector.load %arg7[%281, %c0_63] : memref<8x32xf32, #tpu.memory_space<vmem>>, vector<8x32xf32>
      tpu.vector_store %arg7[%281, %c0_63], %65 {strides = array<i32>} : memref<8x32xf32, #tpu.memory_space<vmem>>, vector<8x32xf32>,
    } else {
    }
    %c2_i32 = arith.constant 2 : i32
    %69 = arith.index_cast %c2_i32 : i32 to index
    %70 = memref.load %arg1[%69] : memref<8xi32, #tpu.memory_space<smem>>
    %71 = arith.index_cast %70 : i32 to index
    %c0_13 = arith.constant 0 : index
    %72 = vector.load %arg2[%71, %c0_13] : memref<50x128xf32, #tpu.memory_space<vmem>>, vector<1x128xf32>
    %73 = arith.truncf %59 : vector<1x32xf32> to vector<1x32xbf16>
    %cst_14 = arith.constant dense<0.000000e+00> : vector<1x128xf32>
    %74 = tpu.matmul %73, %0, %cst_14 {dimension_numbers = #tpu.dot_dimension_numbers<[1], [0], [0], [1], [0, 0, 1, 1], [], []>} : vector<1x32xbf16>, vector<32x128xbf16>, vector<1x128xf32> -> vector<1x128xf32>
    %75 = arith.addf %72, %74 : vector<1x128xf32>
    %76 = vector.extract_strided_slice %75 {offsets = [0, 0], sizes = [1, 96], strides = [1, 1]} : vector<1x128xf32> to vector<1x96xf32>
    %77 = arith.negf %76 : vector<1x96xf32>
    %78 = math.exp %77 : vector<1x96xf32>
    %cst_15 = arith.constant 1.000000e+00 : f32
    %79 = vector.broadcast %cst_15 : f32 to vector<1x96xf32>
    %80 = arith.addf %79, %78 : vector<1x96xf32>
    %81 = arith.divf %79, %80 : vector<1x96xf32>
    %82 = vector.extract_strided_slice %75 {offsets = [0, 96], sizes = [1, 32], strides = [1, 1]} : vector<1x128xf32> to vector<1x32xf32>
    %83 = math.tanh %82 : vector<1x32xf32>
    %84 = vector.extract_strided_slice %81 {offsets = [0, 0], sizes = [1, 32], strides = [1, 1]} : vector<1x96xf32> to vector<1x32xf32>
    %85 = vector.extract_strided_slice %81 {offsets = [0, 32], sizes = [1, 32], strides = [1, 1]} : vector<1x96xf32> to vector<1x32xf32>
    %86 = vector.extract_strided_slice %81 {offsets = [0, 64], sizes = [1, 32], strides = [1, 1]} : vector<1x96xf32> to vector<1x32xf32>
    %87 = arith.mulf %85, %57 : vector<1x32xf32>
    %88 = arith.mulf %84, %83 : vector<1x32xf32>
    %89 = arith.addf %87, %88 : vector<1x32xf32>
    %90 = math.tanh %89 : vector<1x32xf32>
    %91 = arith.mulf %86, %90 : vector<1x32xf32>
    %c8_i32_16 = arith.constant 8 : i32
    %92 = arith.remsi %c2_i32, %c8_i32_16 : i32
    %93 = vector.broadcast %92 : i32 to vector<8x32xi32>
    %94 = arith.cmpi eq, %1, %93 : vector<8x32xi32>
    %95 = vector.shape_cast %91 : vector<1x32xf32> to vector<1x32xf32>
    %96 = vector.broadcast %95 : vector<1x32xf32> to vector<8x32xf32>
    %97 = arith.select %94, %96, %65 : vector<8x32xi1>, vector<8x32xf32>
    %c7_i32_17 = arith.constant 7 : i32
    %98 = arith.cmpi eq, %92, %c7_i32_17 : i32
    %99 = arith.extui %98 : i1 to i32
    %c0_i32_18 = arith.constant 0 : i32
    %100 = arith.cmpi ne, %99, %c0_i32_18 : i32
    scf.if %100 {
      %c7_i32_62 = arith.constant 7 : i32
      %279 = arith.subi %c2_i32, %c7_i32_62 : i32
      %280 = tpu.assume_multiple %279, 8 : i32
      %281 = arith.index_cast %280 : i32 to index
      %c0_63 = arith.constant 0 : index
      %282 = vector.load %arg7[%281, %c0_63] : memref<8x32xf32, #tpu.memory_space<vmem>>, vector<8x32xf32>
      tpu.vector_store %arg7[%281, %c0_63], %97 {strides = array<i32>} : memref<8x32xf32, #tpu.memory_space<vmem>>, vector<8x32xf32>,
    } else {
    }
    %c3_i32 = arith.constant 3 : i32
    %101 = arith.index_cast %c3_i32 : i32 to index
    %102 = memref.load %arg1[%101] : memref<8xi32, #tpu.memory_space<smem>>
    %103 = arith.index_cast %102 : i32 to index
    %c0_19 = arith.constant 0 : index
    %104 = vector.load %arg2[%103, %c0_19] : memref<50x128xf32, #tpu.memory_space<vmem>>, vector<1x128xf32>
    %105 = arith.truncf %91 : vector<1x32xf32> to vector<1x32xbf16>
    %cst_20 = arith.constant dense<0.000000e+00> : vector<1x128xf32>
    %106 = tpu.matmul %105, %0, %cst_20 {dimension_numbers = #tpu.dot_dimension_numbers<[1], [0], [0], [1], [0, 0, 1, 1], [], []>} : vector<1x32xbf16>, vector<32x128xbf16>, vector<1x128xf32> -> vector<1x128xf32>
    %107 = arith.addf %104, %106 : vector<1x128xf32>
    %108 = vector.extract_strided_slice %107 {offsets = [0, 0], sizes = [1, 96], strides = [1, 1]} : vector<1x128xf32> to vector<1x96xf32>
    %109 = arith.negf %108 : vector<1x96xf32>
    %110 = math.exp %109 : vector<1x96xf32>
    %cst_21 = arith.constant 1.000000e+00 : f32
    %111 = vector.broadcast %cst_21 : f32 to vector<1x96xf32>
    %112 = arith.addf %111, %110 : vector<1x96xf32>
    %113 = arith.divf %111, %112 : vector<1x96xf32>
    %114 = vector.extract_strided_slice %107 {offsets = [0, 96], sizes = [1, 32], strides = [1, 1]} : vector<1x128xf32> to vector<1x32xf32>
    %115 = math.tanh %114 : vector<1x32xf32>
    %116 = vector.extract_strided_slice %113 {offsets = [0, 0], sizes = [1, 32], strides = [1, 1]} : vector<1x96xf32> to vector<1x32xf32>
    %117 = vector.extract_strided_slice %113 {offsets = [0, 32], sizes = [1, 32], strides = [1, 1]} : vector<1x96xf32> to vector<1x32xf32>
    %118 = vector.extract_strided_slice %113 {offsets = [0, 64], sizes = [1, 32], strides = [1, 1]} : vector<1x96xf32> to vector<1x32xf32>
    %119 = arith.mulf %117, %89 : vector<1x32xf32>
    %120 = arith.mulf %116, %115 : vector<1x32xf32>
    %121 = arith.addf %119, %120 : vector<1x32xf32>
    %122 = math.tanh %121 : vector<1x32xf32>
    %123 = arith.mulf %118, %122 : vector<1x32xf32>
    %c8_i32_22 = arith.constant 8 : i32
    %124 = arith.remsi %c3_i32, %c8_i32_22 : i32
    %125 = vector.broadcast %124 : i32 to vector<8x32xi32>
    %126 = arith.cmpi eq, %1, %125 : vector<8x32xi32>
    %127 = vector.shape_cast %123 : vector<1x32xf32> to vector<1x32xf32>
    %128 = vector.broadcast %127 : vector<1x32xf32> to vector<8x32xf32>
    %129 = arith.select %126, %128, %97 : vector<8x32xi1>, vector<8x32xf32>
    %c7_i32_23 = arith.constant 7 : i32
    %130 = arith.cmpi eq, %124, %c7_i32_23 : i32
    %131 = arith.extui %130 : i1 to i32
    %c0_i32_24 = arith.constant 0 : i32
    %132 = arith.cmpi ne, %131, %c0_i32_24 : i32
    scf.if %132 {
      %c7_i32_62 = arith.constant 7 : i32
      %279 = arith.subi %c3_i32, %c7_i32_62 : i32
      %280 = tpu.assume_multiple %279, 8 : i32
      %281 = arith.index_cast %280 : i32 to index
      %c0_63 = arith.constant 0 : index
      %282 = vector.load %arg7[%281, %c0_63] : memref<8x32xf32, #tpu.memory_space<vmem>>, vector<8x32xf32>
      tpu.vector_store %arg7[%281, %c0_63], %129 {strides = array<i32>} : memref<8x32xf32, #tpu.memory_space<vmem>>, vector<8x32xf32>,
    } else {
    }
    %c4_i32 = arith.constant 4 : i32
    %133 = arith.index_cast %c4_i32 : i32 to index
    %134 = memref.load %arg1[%133] : memref<8xi32, #tpu.memory_space<smem>>
    %135 = arith.index_cast %134 : i32 to index
    %c0_25 = arith.constant 0 : index
    %136 = vector.load %arg2[%135, %c0_25] : memref<50x128xf32, #tpu.memory_space<vmem>>, vector<1x128xf32>
    %137 = arith.truncf %123 : vector<1x32xf32> to vector<1x32xbf16>
    %cst_26 = arith.constant dense<0.000000e+00> : vector<1x128xf32>
    %138 = tpu.matmul %137, %0, %cst_26 {dimension_numbers = #tpu.dot_dimension_numbers<[1], [0], [0], [1], [0, 0, 1, 1], [], []>} : vector<1x32xbf16>, vector<32x128xbf16>, vector<1x128xf32> -> vector<1x128xf32>
    %139 = arith.addf %136, %138 : vector<1x128xf32>
    %140 = vector.extract_strided_slice %139 {offsets = [0, 0], sizes = [1, 96], strides = [1, 1]} : vector<1x128xf32> to vector<1x96xf32>
    %141 = arith.negf %140 : vector<1x96xf32>
    %142 = math.exp %141 : vector<1x96xf32>
    %cst_27 = arith.constant 1.000000e+00 : f32
    %143 = vector.broadcast %cst_27 : f32 to vector<1x96xf32>
    %144 = arith.addf %143, %142 : vector<1x96xf32>
    %145 = arith.divf %143, %144 : vector<1x96xf32>
    %146 = vector.extract_strided_slice %139 {offsets = [0, 96], sizes = [1, 32], strides = [1, 1]} : vector<1x128xf32> to vector<1x32xf32>
    %147 = math.tanh %146 : vector<1x32xf32>
    %148 = vector.extract_strided_slice %145 {offsets = [0, 0], sizes = [1, 32], strides = [1, 1]} : vector<1x96xf32> to vector<1x32xf32>
    %149 = vector.extract_strided_slice %145 {offsets = [0, 32], sizes = [1, 32], strides = [1, 1]} : vector<1x96xf32> to vector<1x32xf32>
    %150 = vector.extract_strided_slice %145 {offsets = [0, 64], sizes = [1, 32], strides = [1, 1]} : vector<1x96xf32> to vector<1x32xf32>
    %151 = arith.mulf %149, %121 : vector<1x32xf32>
    %152 = arith.mulf %148, %147 : vector<1x32xf32>
    %153 = arith.addf %151, %152 : vector<1x32xf32>
    %154 = math.tanh %153 : vector<1x32xf32>
    %155 = arith.mulf %150, %154 : vector<1x32xf32>
    %c8_i32_28 = arith.constant 8 : i32
    %156 = arith.remsi %c4_i32, %c8_i32_28 : i32
    %157 = vector.broadcast %156 : i32 to vector<8x32xi32>
    %158 = arith.cmpi eq, %1, %157 : vector<8x32xi32>
    %159 = vector.shape_cast %155 : vector<1x32xf32> to vector<1x32xf32>
    %160 = vector.broadcast %159 : vector<1x32xf32> to vector<8x32xf32>
    %161 = arith.select %158, %160, %129 : vector<8x32xi1>, vector<8x32xf32>
    %c7_i32_29 = arith.constant 7 : i32
    %162 = arith.cmpi eq, %156, %c7_i32_29 : i32
    %163 = arith.extui %162 : i1 to i32
    %c0_i32_30 = arith.constant 0 : i32
    %164 = arith.cmpi ne, %163, %c0_i32_30 : i32
    scf.if %164 {
      %c7_i32_62 = arith.constant 7 : i32
      %279 = arith.subi %c4_i32, %c7_i32_62 : i32
      %280 = tpu.assume_multiple %279, 8 : i32
      %281 = arith.index_cast %280 : i32 to index
      %c0_63 = arith.constant 0 : index
      %282 = vector.load %arg7[%281, %c0_63] : memref<8x32xf32, #tpu.memory_space<vmem>>, vector<8x32xf32>
      tpu.vector_store %arg7[%281, %c0_63], %161 {strides = array<i32>} : memref<8x32xf32, #tpu.memory_space<vmem>>, vector<8x32xf32>,
    } else {
    }
    %c5_i32 = arith.constant 5 : i32
    %165 = arith.index_cast %c5_i32 : i32 to index
    %166 = memref.load %arg1[%165] : memref<8xi32, #tpu.memory_space<smem>>
    %167 = arith.index_cast %166 : i32 to index
    %c0_31 = arith.constant 0 : index
    %168 = vector.load %arg2[%167, %c0_31] : memref<50x128xf32, #tpu.memory_space<vmem>>, vector<1x128xf32>
    %169 = arith.truncf %155 : vector<1x32xf32> to vector<1x32xbf16>
    %cst_32 = arith.constant dense<0.000000e+00> : vector<1x128xf32>
    %170 = tpu.matmul %169, %0, %cst_32 {dimension_numbers = #tpu.dot_dimension_numbers<[1], [0], [0], [1], [0, 0, 1, 1], [], []>} : vector<1x32xbf16>, vector<32x128xbf16>, vector<1x128xf32> -> vector<1x128xf32>
    %171 = arith.addf %168, %170 : vector<1x128xf32>
    %172 = vector.extract_strided_slice %171 {offsets = [0, 0], sizes = [1, 96], strides = [1, 1]} : vector<1x128xf32> to vector<1x96xf32>
    %173 = arith.negf %172 : vector<1x96xf32>
    %174 = math.exp %173 : vector<1x96xf32>
    %cst_33 = arith.constant 1.000000e+00 : f32
    %175 = vector.broadcast %cst_33 : f32 to vector<1x96xf32>
    %176 = arith.addf %175, %174 : vector<1x96xf32>
    %177 = arith.divf %175, %176 : vector<1x96xf32>
    %178 = vector.extract_strided_slice %171 {offsets = [0, 96], sizes = [1, 32], strides = [1, 1]} : vector<1x128xf32> to vector<1x32xf32>
    %179 = math.tanh %178 : vector<1x32xf32>
    %180 = vector.extract_strided_slice %177 {offsets = [0, 0], sizes = [1, 32], strides = [1, 1]} : vector<1x96xf32> to vector<1x32xf32>
    %181 = vector.extract_strided_slice %177 {offsets = [0, 32], sizes = [1, 32], strides = [1, 1]} : vector<1x96xf32> to vector<1x32xf32>
    %182 = vector.extract_strided_slice %177 {offsets = [0, 64], sizes = [1, 32], strides = [1, 1]} : vector<1x96xf32> to vector<1x32xf32>
    %183 = arith.mulf %181, %153 : vector<1x32xf32>
    %184 = arith.mulf %180, %179 : vector<1x32xf32>
    %185 = arith.addf %183, %184 : vector<1x32xf32>
    %186 = math.tanh %185 : vector<1x32xf32>
    %187 = arith.mulf %182, %186 : vector<1x32xf32>
    %c8_i32_34 = arith.constant 8 : i32
    %188 = arith.remsi %c5_i32, %c8_i32_34 : i32
    %189 = vector.broadcast %188 : i32 to vector<8x32xi32>
    %190 = arith.cmpi eq, %1, %189 : vector<8x32xi32>
    %191 = vector.shape_cast %187 : vector<1x32xf32> to vector<1x32xf32>
    %192 = vector.broadcast %191 : vector<1x32xf32> to vector<8x32xf32>
    %193 = arith.select %190, %192, %161 : vector<8x32xi1>, vector<8x32xf32>
    %c7_i32_35 = arith.constant 7 : i32
    %194 = arith.cmpi eq, %188, %c7_i32_35 : i32
    %195 = arith.extui %194 : i1 to i32
    %c0_i32_36 = arith.constant 0 : i32
    %196 = arith.cmpi ne, %195, %c0_i32_36 : i32
    scf.if %196 {
      %c7_i32_62 = arith.constant 7 : i32
      %279 = arith.subi %c5_i32, %c7_i32_62 : i32
      %280 = tpu.assume_multiple %279, 8 : i32
      %281 = arith.index_cast %280 : i32 to index
      %c0_63 = arith.constant 0 : index
      %282 = vector.load %arg7[%281, %c0_63] : memref<8x32xf32, #tpu.memory_space<vmem>>, vector<8x32xf32>
      tpu.vector_store %arg7[%281, %c0_63], %193 {strides = array<i32>} : memref<8x32xf32, #tpu.memory_space<vmem>>, vector<8x32xf32>,
    } else {
    }
    %c6_i32 = arith.constant 6 : i32
    %197 = arith.index_cast %c6_i32 : i32 to index
    %198 = memref.load %arg1[%197] : memref<8xi32, #tpu.memory_space<smem>>
    %199 = arith.index_cast %198 : i32 to index
    %c0_37 = arith.constant 0 : index
    %200 = vector.load %arg2[%199, %c0_37] : memref<50x128xf32, #tpu.memory_space<vmem>>, vector<1x128xf32>
    %201 = arith.truncf %187 : vector<1x32xf32> to vector<1x32xbf16>
    %cst_38 = arith.constant dense<0.000000e+00> : vector<1x128xf32>
    %202 = tpu.matmul %201, %0, %cst_38 {dimension_numbers = #tpu.dot_dimension_numbers<[1], [0], [0], [1], [0, 0, 1, 1], [], []>} : vector<1x32xbf16>, vector<32x128xbf16>, vector<1x128xf32> -> vector<1x128xf32>
    %203 = arith.addf %200, %202 : vector<1x128xf32>
    %204 = vector.extract_strided_slice %203 {offsets = [0, 0], sizes = [1, 96], strides = [1, 1]} : vector<1x128xf32> to vector<1x96xf32>
    %205 = arith.negf %204 : vector<1x96xf32>
    %206 = math.exp %205 : vector<1x96xf32>
    %cst_39 = arith.constant 1.000000e+00 : f32
    %207 = vector.broadcast %cst_39 : f32 to vector<1x96xf32>
    %208 = arith.addf %207, %206 : vector<1x96xf32>
    %209 = arith.divf %207, %208 : vector<1x96xf32>
    %210 = vector.extract_strided_slice %203 {offsets = [0, 96], sizes = [1, 32], strides = [1, 1]} : vector<1x128xf32> to vector<1x32xf32>
    %211 = math.tanh %210 : vector<1x32xf32>
    %212 = vector.extract_strided_slice %209 {offsets = [0, 0], sizes = [1, 32], strides = [1, 1]} : vector<1x96xf32> to vector<1x32xf32>
    %213 = vector.extract_strided_slice %209 {offsets = [0, 32], sizes = [1, 32], strides = [1, 1]} : vector<1x96xf32> to vector<1x32xf32>
    %214 = vector.extract_strided_slice %209 {offsets = [0, 64], sizes = [1, 32], strides = [1, 1]} : vector<1x96xf32> to vector<1x32xf32>
    %215 = arith.mulf %213, %185 : vector<1x32xf32>
    %216 = arith.mulf %212, %211 : vector<1x32xf32>
    %217 = arith.addf %215, %216 : vector<1x32xf32>
    %218 = math.tanh %217 : vector<1x32xf32>
    %219 = arith.mulf %214, %218 : vector<1x32xf32>
    %c8_i32_40 = arith.constant 8 : i32
    %220 = arith.remsi %c6_i32, %c8_i32_40 : i32
    %221 = vector.broadcast %220 : i32 to vector<8x32xi32>
    %222 = arith.cmpi eq, %1, %221 : vector<8x32xi32>
    %223 = vector.shape_cast %219 : vector<1x32xf32> to vector<1x32xf32>
    %224 = vector.broadcast %223 : vector<1x32xf32> to vector<8x32xf32>
    %225 = arith.select %222, %224, %193 : vector<8x32xi1>, vector<8x32xf32>
    %c7_i32_41 = arith.constant 7 : i32
    %226 = arith.cmpi eq, %220, %c7_i32_41 : i32
    %227 = arith.extui %226 : i1 to i32
    %c0_i32_42 = arith.constant 0 : i32
    %228 = arith.cmpi ne, %227, %c0_i32_42 : i32
    scf.if %228 {
      %c7_i32_62 = arith.constant 7 : i32
      %279 = arith.subi %c6_i32, %c7_i32_62 : i32
      %280 = tpu.assume_multiple %279, 8 : i32
      %281 = arith.index_cast %280 : i32 to index
      %c0_63 = arith.constant 0 : index
      %282 = vector.load %arg7[%281, %c0_63] : memref<8x32xf32, #tpu.memory_space<vmem>>, vector<8x32xf32>
      tpu.vector_store %arg7[%281, %c0_63], %225 {strides = array<i32>} : memref<8x32xf32, #tpu.memory_space<vmem>>, vector<8x32xf32>,
    } else {
    }
    %c7_i32_43 = arith.constant 7 : i32
    %229 = arith.index_cast %c7_i32_43 : i32 to index
    %230 = memref.load %arg1[%229] : memref<8xi32, #tpu.memory_space<smem>>
    %231 = arith.index_cast %230 : i32 to index
    %c0_44 = arith.constant 0 : index
    %232 = vector.load %arg2[%231, %c0_44] : memref<50x128xf32, #tpu.memory_space<vmem>>, vector<1x128xf32>
    %233 = arith.truncf %219 : vector<1x32xf32> to vector<1x32xbf16>
    %cst_45 = arith.constant dense<0.000000e+00> : vector<1x128xf32>
    %234 = tpu.matmul %233, %0, %cst_45 {dimension_numbers = #tpu.dot_dimension_numbers<[1], [0], [0], [1], [0, 0, 1, 1], [], []>} : vector<1x32xbf16>, vector<32x128xbf16>, vector<1x128xf32> -> vector<1x128xf32>
    %235 = arith.addf %232, %234 : vector<1x128xf32>
    %236 = vector.extract_strided_slice %235 {offsets = [0, 0], sizes = [1, 96], strides = [1, 1]} : vector<1x128xf32> to vector<1x96xf32>
    %237 = arith.negf %236 : vector<1x96xf32>
    %238 = math.exp %237 : vector<1x96xf32>
    %cst_46 = arith.constant 1.000000e+00 : f32
    %239 = vector.broadcast %cst_46 : f32 to vector<1x96xf32>
    %240 = arith.addf %239, %238 : vector<1x96xf32>
    %241 = arith.divf %239, %240 : vector<1x96xf32>
    %242 = vector.extract_strided_slice %235 {offsets = [0, 96], sizes = [1, 32], strides = [1, 1]} : vector<1x128xf32> to vector<1x32xf32>
    %243 = math.tanh %242 : vector<1x32xf32>
    %244 = vector.extract_strided_slice %241 {offsets = [0, 0], sizes = [1, 32], strides = [1, 1]} : vector<1x96xf32> to vector<1x32xf32>
    %245 = vector.extract_strided_slice %241 {offsets = [0, 32], sizes = [1, 32], strides = [1, 1]} : vector<1x96xf32> to vector<1x32xf32>
    %246 = vector.extract_strided_slice %241 {offsets = [0, 64], sizes = [1, 32], strides = [1, 1]} : vector<1x96xf32> to vector<1x32xf32>
    %247 = arith.mulf %245, %217 : vector<1x32xf32>
    %248 = arith.mulf %244, %243 : vector<1x32xf32>
    %249 = arith.addf %247, %248 : vector<1x32xf32>
    %250 = math.tanh %249 : vector<1x32xf32>
    %251 = arith.mulf %246, %250 : vector<1x32xf32>
    %c8_i32_47 = arith.constant 8 : i32
    %252 = arith.remsi %c7_i32_43, %c8_i32_47 : i32
    %253 = vector.broadcast %252 : i32 to vector<8x32xi32>
    %254 = arith.cmpi eq, %1, %253 : vector<8x32xi32>
    %255 = vector.shape_cast %251 : vector<1x32xf32> to vector<1x32xf32>
    %256 = vector.broadcast %255 : vector<1x32xf32> to vector<8x32xf32>
    %257 = arith.select %254, %256, %225 : vector<8x32xi1>, vector<8x32xf32>
    %c7_i32_48 = arith.constant 7 : i32
    %258 = arith.cmpi eq, %252, %c7_i32_48 : i32
    %259 = arith.extui %258 : i1 to i32
    %c0_i32_49 = arith.constant 0 : i32
    %260 = arith.cmpi ne, %259, %c0_i32_49 : i32
    scf.if %260 {
      %c7_i32_62 = arith.constant 7 : i32
      %279 = arith.subi %c7_i32_43, %c7_i32_62 : i32
      %280 = tpu.assume_multiple %279, 8 : i32
      %281 = arith.index_cast %280 : i32 to index
      %c0_63 = arith.constant 0 : index
      %282 = vector.load %arg7[%281, %c0_63] : memref<8x32xf32, #tpu.memory_space<vmem>>, vector<8x32xf32>
      tpu.vector_store %arg7[%281, %c0_63], %257 {strides = array<i32>} : memref<8x32xf32, #tpu.memory_space<vmem>>, vector<8x32xf32>,
    } else {
    }
    %c8_i32_50 = arith.constant 8 : i32
    %c0_51 = arith.constant 0 : index
    %c0_52 = arith.constant 0 : index
    %261 = vector.load %arg7[%c0_51, %c0_52] : memref<8x32xf32, #tpu.memory_space<vmem>>, vector<8x32xf32>
    %262 = arith.truncf %261 : vector<8x32xf32> to vector<8x32xbf16>
    %c0_53 = arith.constant 0 : index
    %c0_54 = arith.constant 0 : index
    %263 = vector.load %arg4[%c0_53, %c0_54] : memref<32x128xbf16, #tpu.memory_space<vmem>>, vector<32x128xbf16>
    %cst_55 = arith.constant dense<0.000000e+00> : vector<8x128xf32>
    %264 = tpu.matmul %262, %263, %cst_55 {dimension_numbers = #tpu.dot_dimension_numbers<[1], [0], [0], [1], [0, 0, 1, 1], [], []>} : vector<8x32xbf16>, vector<32x128xbf16>, vector<8x128xf32> -> vector<8x128xf32>
    %c0_56 = arith.constant 0 : index
    %c0_57 = arith.constant 0 : index
    %265 = vector.load %arg5[%c0_56, %c0_57] : memref<1x128xf32, #tpu.memory_space<vmem>>, vector<1x128xf32>
    %266 = vector.broadcast %265 : vector<1x128xf32> to vector<8x128xf32>
    %267 = arith.addf %264, %266 : vector<8x128xf32>
    %cst_58 = arith.constant dense<0xFF800000> : vector<8xf32>
    %268 = vector.multi_reduction <maximumf>, %267, %cst_58 [1] : vector<8x128xf32> to vector<8xf32>
    %269 = vector.shape_cast %268 : vector<8xf32> to vector<8x1xf32>
    %270 = vector.broadcast %269 : vector<8x1xf32> to vector<8x128xf32>
    %271 = arith.subf %267, %270 : vector<8x128xf32>
    %272 = math.exp %271 : vector<8x128xf32>
    %cst_59 = arith.constant dense<0.000000e+00> : vector<8xf32>
    %273 = vector.multi_reduction <add>, %272, %cst_59 [1] : vector<8x128xf32> to vector<8xf32>
    %274 = vector.shape_cast %273 : vector<8xf32> to vector<8x1xf32>
    %275 = math.log %274 : vector<8x1xf32>
    %276 = vector.broadcast %275 : vector<8x1xf32> to vector<8x128xf32>
    %277 = arith.subf %271, %276 : vector<8x128xf32>
    %c0_60 = arith.constant 0 : index
    %c0_61 = arith.constant 0 : index
    %278 = vector.load %arg6[%c0_60, %c0_61] : memref<8x128xf32, #tpu.memory_space<vmem>>, vector<8x128xf32>
    tpu.vector_store %arg6[%c0_60, %c0_61], %277 {strides = array<i32>} : memref<8x128xf32, #tpu.memory_space<vmem>>, vector<8x128xf32>,
    return
  }
  func.func @transform_0(%arg0: i32, %arg1: memref<8xi32, #tpu.memory_space<smem>>) -> (i32, i32) {
    %c0_i32 = arith.constant 0 : i32
    %c0_i32_0 = arith.constant 0 : i32
    %c0_i32_1 = arith.constant 0 : i32
    return %c0_i32, %c0_i32_0 : i32, i32
  }
  func.func @transform_1(%arg0: i32, %arg1: memref<8xi32, #tpu.memory_space<smem>>) -> (i32, i32) {
    %c0_i32 = arith.constant 0 : i32
    %c0_i32_0 = arith.constant 0 : i32
    %c0_i32_1 = arith.constant 0 : i32
    return %c0_i32, %c0_i32_0 : i32, i32
  }
  func.func @transform_2(%arg0: i32, %arg1: memref<8xi32, #tpu.memory_space<smem>>) -> (i32, i32) {
    %c0_i32 = arith.constant 0 : i32
    %c0_i32_0 = arith.constant 0 : i32
    %c0_i32_1 = arith.constant 0 : i32
    return %c0_i32, %c0_i32_0 : i32, i32
  }
  func.func @transform_3(%arg0: i32, %arg1: memref<8xi32, #tpu.memory_space<smem>>) -> (i32, i32) {
    %c0_i32 = arith.constant 0 : i32
    %c0_i32_0 = arith.constant 0 : i32
    %c0_i32_1 = arith.constant 0 : i32
    return %c0_i32, %c0_i32_0 : i32, i32
  }
  func.func @transform_4(%arg0: i32, %arg1: memref<8xi32, #tpu.memory_space<smem>>) -> (i32, i32) {
    %c0_i32 = arith.constant 0 : i32
    %c0_i32_0 = arith.constant 0 : i32
    %c0_i32_1 = arith.constant 0 : i32
    return %c0_i32, %c0_i32_0 : i32, i32
  }
}

</mosaic_0001>

<llo_original>
// kernel: lstm_model_forward.1
$region0: #{lstm_model_forward.1}
  #allocation0 [shape = 'u32[]', space=smem, size = 0x4, offset = 0x4, fixed_abs, tag = 'smem constant byte address 0x4 - core index']
  #allocation1 [shape = 'u32[144,128]{1,0:T(1,128)}', space=vmem, size = 0x12000, scoped, tag = 'internal scratch']
  #allocation2 [shape = 'f32[8,32]{1,0:T(8,128)}', space=vmem, size = 0x1000, scoped, tag = 'scratch operand']
  #allocation3 [shape = 's32[1]{0}', space=sflag, size = 0x4, scoped, tag = 'scoped memory for lstm_model_forward.1']
  #allocation4 [shape = 'u8[512]{0}', space=smem, size = 0x200, scoped, tag = 'prefetched SMEM operand 0']
  %s0 = inlined_call_operand.vmem [shape: s32[8], index: 0, kind: input, shape index: {}]
  %s1 = inlined_call_operand.vmem [shape: f32[50,128], index: 1, kind: input, shape index: {}]
  %s2 = inlined_call_operand.vmem [shape: bf16[32,128], index: 2, kind: input, shape index: {}]
  %s3 = inlined_call_operand.vmem [shape: bf16[32,128], index: 3, kind: input, shape index: {}]
  %s4 = inlined_call_operand.vmem [shape: f32[1,128], index: 4, kind: input, shape index: {}]
  %s5 = inlined_call_operand.hbm [shape: f32[8,128], index: 5, kind: output, shape index: {}]
  %s6 = sld [smem:[#allocation0]]
  $region26: #{lstm_model_forward.1} parent=0
    _
  %s8 = ssub.s32 1, %s6
  %s9 = scalar_select 0, %s8, %s6
  %s10 = sshll.u32 %s0, 4
  %s11 = int_to_ptr.vmem [resolvable:$true] %s10
  %13 = dma.vmem_to_smem %s11, 16, [#allocation4], [#allocation3]
  %14 = dma.done [#allocation3], 16
  %15 = sfence
  $region1: #{lstm_model_forward.1} parent=0
    #allocation5 [shape = 'u8[4096]{0}', space=vmem, size = 0x1000, scoped, tag = 'output window, operand 0, single buffered']
    #allocation6 [shape = 's32[1]{0}', space=sflag, size = 0x4, scoped, tag = 'scoped memory for lstm_model_forward.1']
    %16 = vsyncpa [#allocation6], 0
    // Predicated region
    $region2: #{lstm_model_forward.1} parent=1 // pred_check
      _
    $region3: #{lstm_model_forward.1} parent=1 // pred_check_branch
      %18 = sbr.rel (0) target = $region5
    $region4: #{lstm_model_forward.1} parent=1 // pred_region
      _
    $region5: #{lstm_model_forward.1} parent=1 // pred_fallthru
      _
    // Predicated region
    $region6: #{lstm_model_forward.1} parent=1 // pred_check
      _
    $region7: #{lstm_model_forward.1} parent=1 // pred_check_branch
      %20 = sbr.rel (0) target = $region9
    $region8: #{lstm_model_forward.1} parent=1 // pred_region
      _
    $region9: #{lstm_model_forward.1} parent=1 // pred_fallthru
      _
    // Predicated region
    $region10: #{lstm_model_forward.1} parent=1 // pred_check
      _
    $region11: #{lstm_model_forward.1} parent=1 // pred_check_branch
      %22 = sbr.rel (0) target = $region13
    $region12: #{lstm_model_forward.1} parent=1 // pred_region
      _
    $region13: #{lstm_model_forward.1} parent=1 // pred_fallthru
      _
    // Predicated region
    $region14: #{lstm_model_forward.1} parent=1 // pred_check
      _
    $region15: #{lstm_model_forward.1} parent=1 // pred_check_branch
      %24 = sbr.rel (0) target = $region17
    $region16: #{lstm_model_forward.1} parent=1 // pred_region
      _
    $region17: #{lstm_model_forward.1} parent=1 // pred_fallthru
      _
    %v26 = vld [vmem:[%s2] sm:$0xf]
    %v27 = vld [vmem:[%s2 + $0x4] sm:$0xf]
    %v28 = vld [vmem:[%s2 + $0x8] sm:$0xf]
    %v29 = vld [vmem:[%s2 + $0xc] sm:$0xf]
    %v30 = vlaneseq
    %v31 = vshrl.u32 %v30, 7
    %s32 = sld [smem:[#allocation4]]
    %s33 = scalar_lea.vmem %s1, %s32
    %v34 = vld [vmem:[%s33] sm:$0x1]
    %v39 = vunpack.c.l.b16 %v26
    %v40 = vunpack.c.l.b16 %v27
    %v41 = vunpack.c.l.b16 %v28
    %v42 = vunpack.c.l.b16 %v29
    %v43 = vpack.c.b16 %v40, %v39
    %v44 = vpack.c.b16 %v42, %v41
    %vm47 = vcmask 261120
    %v49 = vsel %vm47, 0, 0
    %51 = vmatprep.subr.bf16.mxu0 0
    %52 = vmatpush1.bf16.msra.mxu0 %v43
    %53 = vmatprep.subr.bf16.mxu0 0
    %54 = vmatpush1.bf16.msra.mxu0 %v44
    %55 = vmatprep.subr.bf16.mxu0 0
    %56 = vmatpush1.bf16.msra.mxu0 0
    %57 = vmatprep.subr.bf16.mxu0 0
    %58 = vmatpush1.bf16.msra.mxu0 0
    %59 = vmatprep.subr.bf16.mxu0 0
    %60 = vmatpush1.bf16.msra.mxu0 0
    %61 = vmatprep.subr.bf16.mxu0 0
    %62 = vmatpush1.bf16.msra.mxu0 0
    %63 = vmatprep.subr.bf16.mxu0 0
    %64 = vmatpush1.bf16.msra.mxu0 0
    %65 = vmatprep.subr.bf16.mxu0 0
    %66 = vmatpush1.bf16.msra.mxu0 0
    %67 = vmatprep.subr.bf16.mxu0 0
    %68 = vmatpush1.bf16.msra.mxu0 0
    %69 = vmatprep.subr.bf16.mxu0 0
    %70 = vmatpush1.bf16.msra.mxu0 0
    %71 = vmatprep.subr.bf16.mxu0 0
    %72 = vmatpush1.bf16.msra.mxu0 0
    %73 = vmatprep.subr.bf16.mxu0 0
    %74 = vmatpush1.bf16.msra.mxu0 0
    %75 = vmatprep.subr.bf16.mxu0 0
    %76 = vmatpush1.bf16.msra.mxu0 0
    %77 = vmatprep.subr.bf16.mxu0 0
    %78 = vmatpush1.bf16.msra.mxu0 0
    %79 = vmatprep.subr.bf16.mxu0 0
    %80 = vmatpush1.bf16.msra.mxu0 0
    %81 = vmatprep.subr.bf16.mxu0 0
    %82 = vmatpush1.bf16.msra.mxu0 0
    %83 = vmatprep.mubr.bf16.mxu0 0
    %84 = vmatmul.mubr.bf16.gmra.mrb[0].mxu0 %v49
    %v85 = vpop.f32.mrb[0].mxu0
    %v86 = vadd.f32 0.0, %v85
    %v87 = vpop.f32.mrb[0].mxu0
    %v88 = vpop.f32.mrb[0].mxu0
    %v89 = vpop.f32.mrb[0].mxu0
    %90 = vdwg.mxu0
    %v91 = vadd.f32 %v34, %v86
    %v92 = vxor.u32 %v91, 2147483648
    %v93 = vmul.f32 %v92, 1.442695
    %v94 = vpow.pop %v93
    %v95 = vadd.f32 %v94, 1.0
    %v96 = vrcp.pop %v95
    %v97 = vmul.f32 1.0, %v96
    %v98 = vtanh.pop %v91
    %v99 = vmul.f32 %v97, 0.0
    %101 = vrot.lane.b32.xlu0 %v98, 32
    %v102 = vpop.permute.xlu0 %101
    %v104 = vmul.f32 %v97, %v102
    %106 = vrot.lane.b32.xlu0 %v104, 32
    %v107 = vpop.permute.xlu0 %106
    %v109 = vadd.f32 %v99, %v107
    %v110 = vtanh.pop %v109
    %112 = vrot.lane.b32.xlu0 %v110, 32
    %v113 = vpop.permute.xlu0 %112
    %v115 = vmul.f32 %v97, %v113
    %vm116 = vcmp.eq.s32.totalorder %v31, 0
    %v117 = vlaneseq
    %v118 = vshrl.u32 %v117, 7
    %v119 = vsub.s32 0, %v118
    %v120 = vrot.slane %v115, %v119
    %v121 = vsel %vm116, %v120, 0.0
    %s122 = sld [smem:[#allocation4 + $0x1]]
    %s123 = scalar_lea.vmem %s1, %s122
    %v124 = vld [vmem:[%s123] sm:$0x1]
    %v125 = vpack.c.bf16 %v115, %v115
    %127 = vrot.lane.b32.xlu0 %v125, 64
    %v128 = vpop.permute.xlu0 %127
    %v130 = vsel %vm47, %v128, 0
    %132 = vmatprep.subr.bf16.mxu0 0
    %133 = vmatpush1.bf16.msra.mxu0 %v43
    %134 = vmatprep.subr.bf16.mxu0 0
    %135 = vmatpush1.bf16.msra.mxu0 %v44
    %136 = vmatprep.subr.bf16.mxu0 0
    %137 = vmatpush1.bf16.msra.mxu0 0
    %138 = vmatprep.subr.bf16.mxu0 0
    %139 = vmatpush1.bf16.msra.mxu0 0
    %140 = vmatprep.subr.bf16.mxu0 0
    %141 = vmatpush1.bf16.msra.mxu0 0
    %142 = vmatprep.subr.bf16.mxu0 0
    %143 = vmatpush1.bf16.msra.mxu0 0
    %144 = vmatprep.subr.bf16.mxu0 0
    %145 = vmatpush1.bf16.msra.mxu0 0
    %146 = vmatprep.subr.bf16.mxu0 0
    %147 = vmatpush1.bf16.msra.mxu0 0
    %148 = vmatprep.subr.bf16.mxu0 0
    %149 = vmatpush1.bf16.msra.mxu0 0
    %150 = vmatprep.subr.bf16.mxu0 0
    %151 = vmatpush1.bf16.msra.mxu0 0
    %152 = vmatprep.subr.bf16.mxu0 0
    %153 = vmatpush1.bf16.msra.mxu0 0
    %154 = vmatprep.subr.bf16.mxu0 0
    %155 = vmatpush1.bf16.msra.mxu0 0
    %156 = vmatprep.subr.bf16.mxu0 0
    %157 = vmatpush1.bf16.msra.mxu0 0
    %158 = vmatprep.subr.bf16.mxu0 0
    %159 = vmatpush1.bf16.msra.mxu0 0
    %160 = vmatprep.subr.bf16.mxu0 0
    %161 = vmatpush1.bf16.msra.mxu0 0
    %162 = vmatprep.subr.bf16.mxu0 0
    %163 = vmatpush1.bf16.msra.mxu0 0
    %164 = vmatprep.mubr.bf16.mxu0 0
    %165 = vmatmul.mubr.bf16.gmra.mrb[0].mxu0 %v130
    %v166 = vpop.f32.mrb[0].mxu0
    %v167 = vadd.f32 0.0, %v166
    %v168 = vpop.f32.mrb[0].mxu0
    %v169 = vpop.f32.mrb[0].mxu0
    %v170 = vpop.f32.mrb[0].mxu0
    %171 = vdwg.mxu0
    %v172 = vadd.f32 %v124, %v167
    %v173 = vxor.u32 %v172, 2147483648
    %v174 = vmul.f32 %v173, 1.442695
    %v175 = vpow.pop %v174
    %v176 = vadd.f32 %v175, 1.0
    %v177 = vrcp.pop %v176
    %v178 = vmul.f32 1.0, %v177
    %v179 = vtanh.pop %v172
    %v180 = vmul.f32 %v178, %v109
    %182 = vrot.lane.b32.xlu0 %v179, 32
    %v183 = vpop.permute.xlu0 %182
    %v185 = vmul.f32 %v178, %v183
    %187 = vrot.lane.b32.xlu0 %v185, 32
    %v188 = vpop.permute.xlu0 %187
    %v190 = vadd.f32 %v180, %v188
    %v191 = vtanh.pop %v190
    %193 = vrot.lane.b32.xlu0 %v191, 32
    %v194 = vpop.permute.xlu0 %193
    %v196 = vmul.f32 %v178, %v194
    %vm197 = vcmp.eq.s32.totalorder %v31, 1
    %v198 = vlaneseq
    %v199 = vshrl.u32 %v198, 7
    %v200 = vsub.s32 0, %v199
    %v201 = vrot.slane %v196, %v200
    %v202 = vsel %vm197, %v201, %v121
    %s203 = sld [smem:[#allocation4 + $0x2]]
    %s204 = scalar_lea.vmem %s1, %s203
    %v205 = vld [vmem:[%s204] sm:$0x1]
    %v206 = vpack.c.bf16 %v196, %v196
    %208 = vrot.lane.b32.xlu0 %v206, 64
    %v209 = vpop.permute.xlu0 %208
    %v211 = vsel %vm47, %v209, 0
    %213 = vmatprep.subr.bf16.mxu0 0
    %214 = vmatpush1.bf16.msra.mxu0 %v43
    %215 = vmatprep.subr.bf16.mxu0 0
    %216 = vmatpush1.bf16.msra.mxu0 %v44
    %217 = vmatprep.subr.bf16.mxu0 0
    %218 = vmatpush1.bf16.msra.mxu0 0
    %219 = vmatprep.subr.bf16.mxu0 0
    %220 = vmatpush1.bf16.msra.mxu0 0
    %221 = vmatprep.subr.bf16.mxu0 0
    %222 = vmatpush1.bf16.msra.mxu0 0
    %223 = vmatprep.subr.bf16.mxu0 0
    %224 = vmatpush1.bf16.msra.mxu0 0
    %225 = vmatprep.subr.bf16.mxu0 0
    %226 = vmatpush1.bf16.msra.mxu0 0
    %227 = vmatprep.subr.bf16.mxu0 0
    %228 = vmatpush1.bf16.msra.mxu0 0
    %229 = vmatprep.subr.bf16.mxu0 0
    %230 = vmatpush1.bf16.msra.mxu0 0
    %231 = vmatprep.subr.bf16.mxu0 0
    %232 = vmatpush1.bf16.msra.mxu0 0
    %233 = vmatprep.subr.bf16.mxu0 0
    %234 = vmatpush1.bf16.msra.mxu0 0
    %235 = vmatprep.subr.bf16.mxu0 0
    %236 = vmatpush1.bf16.msra.mxu0 0
    %237 = vmatprep.subr.bf16.mxu0 0
    %238 = vmatpush1.bf16.msra.mxu0 0
    %239 = vmatprep.subr.bf16.mxu0 0
    %240 = vmatpush1.bf16.msra.mxu0 0
    %241 = vmatprep.subr.bf16.mxu0 0
    %242 = vmatpush1.bf16.msra.mxu0 0
    %243 = vmatprep.subr.bf16.mxu0 0
    %244 = vmatpush1.bf16.msra.mxu0 0
    %245 = vmatprep.mubr.bf16.mxu0 0
    %246 = vmatmul.mubr.bf16.gmra.mrb[0].mxu0 %v211
    %v247 = vpop.f32.mrb[0].mxu0
    %v248 = vadd.f32 0.0, %v247
    %v249 = vpop.f32.mrb[0].mxu0
    %v250 = vpop.f32.mrb[0].mxu0
    %v251 = vpop.f32.mrb[0].mxu0
    %252 = vdwg.mxu0
    %v253 = vadd.f32 %v205, %v248
    %v254 = vxor.u32 %v253, 2147483648
    %v255 = vmul.f32 %v254, 1.442695
    %v256 = vpow.pop %v255
    %v257 = vadd.f32 %v256, 1.0
    %v258 = vrcp.pop %v257
    %v259 = vmul.f32 1.0, %v258
    %v260 = vtanh.pop %v253
    %v261 = vmul.f32 %v259, %v190
    %263 = vrot.lane.b32.xlu0 %v260, 32
    %v264 = vpop.permute.xlu0 %263
    %v266 = vmul.f32 %v259, %v264
    %268 = vrot.lane.b32.xlu0 %v266, 32
    %v269 = vpop.permute.xlu0 %268
    %v271 = vadd.f32 %v261, %v269
    %v272 = vtanh.pop %v271
    %274 = vrot.lane.b32.xlu0 %v272, 32
    %v275 = vpop.permute.xlu0 %274
    %v277 = vmul.f32 %v259, %v275
    %vm278 = vcmp.eq.s32.totalorder %v31, 2
    %v279 = vlaneseq
    %v280 = vshrl.u32 %v279, 7
    %v281 = vsub.s32 0, %v280
    %v282 = vrot.slane %v277, %v281
    %v283 = vsel %vm278, %v282, %v202
    %s284 = sld [smem:[#allocation4 + $0x3]]
    %s285 = scalar_lea.vmem %s1, %s284
    %v286 = vld [vmem:[%s285] sm:$0x1]
    %v287 = vpack.c.bf16 %v277, %v277
    %289 = vrot.lane.b32.xlu0 %v287, 64
    %v290 = vpop.permute.xlu0 %289
    %v292 = vsel %vm47, %v290, 0
    %294 = vmatprep.subr.bf16.mxu0 0
    %295 = vmatpush1.bf16.msra.mxu0 %v43
    %296 = vmatprep.subr.bf16.mxu0 0
    %297 = vmatpush1.bf16.msra.mxu0 %v44
    %298 = vmatprep.subr.bf16.mxu0 0
    %299 = vmatpush1.bf16.msra.mxu0 0
    %300 = vmatprep.subr.bf16.mxu0 0
    %301 = vmatpush1.bf16.msra.mxu0 0
    %302 = vmatprep.subr.bf16.mxu0 0
    %303 = vmatpush1.bf16.msra.mxu0 0
    %304 = vmatprep.subr.bf16.mxu0 0
    %305 = vmatpush1.bf16.msra.mxu0 0
    %306 = vmatprep.subr.bf16.mxu0 0
    %307 = vmatpush1.bf16.msra.mxu0 0
    %308 = vmatprep.subr.bf16.mxu0 0
    %309 = vmatpush1.bf16.msra.mxu0 0
    %310 = vmatprep.subr.bf16.mxu0 0
    %311 = vmatpush1.bf16.msra.mxu0 0
    %312 = vmatprep.subr.bf16.mxu0 0
    %313 = vmatpush1.bf16.msra.mxu0 0
    %314 = vmatprep.subr.bf16.mxu0 0
    %315 = vmatpush1.bf16.msra.mxu0 0
    %316 = vmatprep.subr.bf16.mxu0 0
    %317 = vmatpush1.bf16.msra.mxu0 0
    %318 = vmatprep.subr.bf16.mxu0 0
    %319 = vmatpush1.bf16.msra.mxu0 0
    %320 = vmatprep.subr.bf16.mxu0 0
    %321 = vmatpush1.bf16.msra.mxu0 0
    %322 = vmatprep.subr.bf16.mxu0 0
    %323 = vmatpush1.bf16.msra.mxu0 0
    %324 = vmatprep.subr.bf16.mxu0 0
    %325 = vmatpush1.bf16.msra.mxu0 0
    %326 = vmatprep.mubr.bf16.mxu0 0
    %327 = vmatmul.mubr.bf16.gmra.mrb[0].mxu0 %v292
    %v328 = vpop.f32.mrb[0].mxu0
    %v329 = vadd.f32 0.0, %v328
    %v330 = vpop.f32.mrb[0].mxu0
    %v331 = vpop.f32.mrb[0].mxu0
    %v332 = vpop.f32.mrb[0].mxu0
    %333 = vdwg.mxu0
    %v334 = vadd.f32 %v286, %v329
    %v335 = vxor.u32 %v334, 2147483648
    %v336 = vmul.f32 %v335, 1.442695
    %v337 = vpow.pop %v336
    %v338 = vadd.f32 %v337, 1.0
    %v339 = vrcp.pop %v338
    %v340 = vmul.f32 1.0, %v339
    %v341 = vtanh.pop %v334
    %v342 = vmul.f32 %v340, %v271
    %344 = vrot.lane.b32.xlu0 %v341, 32
    %v345 = vpop.permute.xlu0 %344
    %v347 = vmul.f32 %v340, %v345
    %349 = vrot.lane.b32.xlu0 %v347, 32
    %v350 = vpop.permute.xlu0 %349
    %v352 = vadd.f32 %v342, %v350
    %v353 = vtanh.pop %v352
    %355 = vrot.lane.b32.xlu0 %v353, 32
    %v356 = vpop.permute.xlu0 %355
    %v358 = vmul.f32 %v340, %v356
    %vm359 = vcmp.eq.s32.totalorder %v31, 3
    %v360 = vlaneseq
    %v361 = vshrl.u32 %v360, 7
    %v362 = vsub.s32 0, %v361
    %v363 = vrot.slane %v358, %v362
    %v364 = vsel %vm359, %v363, %v283
    %s365 = sld [smem:[#allocation4 + $0x4]]
    %s366 = scalar_lea.vmem %s1, %s365
    %v367 = vld [vmem:[%s366] sm:$0x1]
    %v368 = vpack.c.bf16 %v358, %v358
    %370 = vrot.lane.b32.xlu0 %v368, 64
    %v371 = vpop.permute.xlu0 %370
    %v373 = vsel %vm47, %v371, 0
    %375 = vmatprep.subr.bf16.mxu0 0
    %376 = vmatpush1.bf16.msra.mxu0 %v43
    %377 = vmatprep.subr.bf16.mxu0 0
    %378 = vmatpush1.bf16.msra.mxu0 %v44
    %379 = vmatprep.subr.bf16.mxu0 0
    %380 = vmatpush1.bf16.msra.mxu0 0
    %381 = vmatprep.subr.bf16.mxu0 0
    %382 = vmatpush1.bf16.msra.mxu0 0
    %383 = vmatprep.subr.bf16.mxu0 0
    %384 = vmatpush1.bf16.msra.mxu0 0
    %385 = vmatprep.subr.bf16.mxu0 0
    %386 = vmatpush1.bf16.msra.mxu0 0
    %387 = vmatprep.subr.bf16.mxu0 0
    %388 = vmatpush1.bf16.msra.mxu0 0
    %389 = vmatprep.subr.bf16.mxu0 0
    %390 = vmatpush1.bf16.msra.mxu0 0
    %391 = vmatprep.subr.bf16.mxu0 0
    %392 = vmatpush1.bf16.msra.mxu0 0
    %393 = vmatprep.subr.bf16.mxu0 0
    %394 = vmatpush1.bf16.msra.mxu0 0
    %395 = vmatprep.subr.bf16.mxu0 0
    %396 = vmatpush1.bf16.msra.mxu0 0
    %397 = vmatprep.subr.bf16.mxu0 0
    %398 = vmatpush1.bf16.msra.mxu0 0
    %399 = vmatprep.subr.bf16.mxu0 0
    %400 = vmatpush1.bf16.msra.mxu0 0
    %401 = vmatprep.subr.bf16.mxu0 0
    %402 = vmatpush1.bf16.msra.mxu0 0
    %403 = vmatprep.subr.bf16.mxu0 0
    %404 = vmatpush1.bf16.msra.mxu0 0
    %405 = vmatprep.subr.bf16.mxu0 0
    %406 = vmatpush1.bf16.msra.mxu0 0
    %407 = vmatprep.mubr.bf16.mxu0 0
    %408 = vmatmul.mubr.bf16.gmra.mrb[0].mxu0 %v373
    %v409 = vpop.f32.mrb[0].mxu0
    %v410 = vadd.f32 0.0, %v409
    %v411 = vpop.f32.mrb[0].mxu0
    %v412 = vpop.f32.mrb[0].mxu0
    %v413 = vpop.f32.mrb[0].mxu0
    %414 = vdwg.mxu0
    %v415 = vadd.f32 %v367, %v410
    %v416 = vxor.u32 %v415, 2147483648
    %v417 = vmul.f32 %v416, 1.442695
    %v418 = vpow.pop %v417
    %v419 = vadd.f32 %v418, 1.0
    %v420 = vrcp.pop %v419
    %v421 = vmul.f32 1.0, %v420
    %v422 = vtanh.pop %v415
    %v423 = vmul.f32 %v421, %v352
    %425 = vrot.lane.b32.xlu0 %v422, 32
    %v426 = vpop.permute.xlu0 %425
    %v428 = vmul.f32 %v421, %v426
    %430 = vrot.lane.b32.xlu0 %v428, 32
    %v431 = vpop.permute.xlu0 %430
    %v433 = vadd.f32 %v423, %v431
    %v434 = vtanh.pop %v433
    %436 = vrot.lane.b32.xlu0 %v434, 32
    %v437 = vpop.permute.xlu0 %436
    %v439 = vmul.f32 %v421, %v437
    %vm440 = vcmp.eq.s32.totalorder %v31, 4
    %v441 = vlaneseq
    %v442 = vshrl.u32 %v441, 7
    %v443 = vsub.s32 0, %v442
    %v444 = vrot.slane %v439, %v443
    %v445 = vsel %vm440, %v444, %v364
    %s446 = sld [smem:[#allocation4 + $0x5]]
    %s447 = scalar_lea.vmem %s1, %s446
    %v448 = vld [vmem:[%s447] sm:$0x1]
    %v449 = vpack.c.bf16 %v439, %v439
    %451 = vrot.lane.b32.xlu0 %v449, 64
    %v452 = vpop.permute.xlu0 %451
    %v454 = vsel %vm47, %v452, 0
    %456 = vmatprep.subr.bf16.mxu0 0
    %457 = vmatpush1.bf16.msra.mxu0 %v43
    %458 = vmatprep.subr.bf16.mxu0 0
    %459 = vmatpush1.bf16.msra.mxu0 %v44
    %460 = vmatprep.subr.bf16.mxu0 0
    %461 = vmatpush1.bf16.msra.mxu0 0
    %462 = vmatprep.subr.bf16.mxu0 0
    %463 = vmatpush1.bf16.msra.mxu0 0
    %464 = vmatprep.subr.bf16.mxu0 0
    %465 = vmatpush1.bf16.msra.mxu0 0
    %466 = vmatprep.subr.bf16.mxu0 0
    %467 = vmatpush1.bf16.msra.mxu0 0
    %468 = vmatprep.subr.bf16.mxu0 0
    %469 = vmatpush1.bf16.msra.mxu0 0
    %470 = vmatprep.subr.bf16.mxu0 0
    %471 = vmatpush1.bf16.msra.mxu0 0
    %472 = vmatprep.subr.bf16.mxu0 0
    %473 = vmatpush1.bf16.msra.mxu0 0
    %474 = vmatprep.subr.bf16.mxu0 0
    %475 = vmatpush1.bf16.msra.mxu0 0
    %476 = vmatprep.subr.bf16.mxu0 0
    %477 = vmatpush1.bf16.msra.mxu0 0
    %478 = vmatprep.subr.bf16.mxu0 0
    %479 = vmatpush1.bf16.msra.mxu0 0
    %480 = vmatprep.subr.bf16.mxu0 0
    %481 = vmatpush1.bf16.msra.mxu0 0
    %482 = vmatprep.subr.bf16.mxu0 0
    %483 = vmatpush1.bf16.msra.mxu0 0
    %484 = vmatprep.subr.bf16.mxu0 0
    %485 = vmatpush1.bf16.msra.mxu0 0
    %486 = vmatprep.subr.bf16.mxu0 0
    %487 = vmatpush1.bf16.msra.mxu0 0
    %488 = vmatprep.mubr.bf16.mxu0 0
    %489 = vmatmul.mubr.bf16.gmra.mrb[0].mxu0 %v454
    %v490 = vpop.f32.mrb[0].mxu0
    %v491 = vadd.f32 0.0, %v490
    %v492 = vpop.f32.mrb[0].mxu0
    %v493 = vpop.f32.mrb[0].mxu0
    %v494 = vpop.f32.mrb[0].mxu0
    %495 = vdwg.mxu0
    %v496 = vadd.f32 %v448, %v491
    %v497 = vxor.u32 %v496, 2147483648
    %v498 = vmul.f32 %v497, 1.442695
    %v499 = vpow.pop %v498
    %v500 = vadd.f32 %v499, 1.0
    %v501 = vrcp.pop %v500
    %v502 = vmul.f32 1.0, %v501
    %v503 = vtanh.pop %v496
    %v504 = vmul.f32 %v502, %v433
    %506 = vrot.lane.b32.xlu0 %v503, 32
    %v507 = vpop.permute.xlu0 %506
    %v509 = vmul.f32 %v502, %v507
    %511 = vrot.lane.b32.xlu0 %v509, 32
    %v512 = vpop.permute.xlu0 %511
    %v514 = vadd.f32 %v504, %v512
    %v515 = vtanh.pop %v514
    %517 = vrot.lane.b32.xlu0 %v515, 32
    %v518 = vpop.permute.xlu0 %517
    %v520 = vmul.f32 %v502, %v518
    %vm521 = vcmp.eq.s32.totalorder %v31, 5
    %v522 = vlaneseq
    %v523 = vshrl.u32 %v522, 7
    %v524 = vsub.s32 0, %v523
    %v525 = vrot.slane %v520, %v524
    %v526 = vsel %vm521, %v525, %v445
    %s527 = sld [smem:[#allocation4 + $0x6]]
    %s528 = scalar_lea.vmem %s1, %s527
    %v529 = vld [vmem:[%s528] sm:$0x1]
    %v530 = vpack.c.bf16 %v520, %v520
    %532 = vrot.lane.b32.xlu0 %v530, 64
    %v533 = vpop.permute.xlu0 %532
    %v535 = vsel %vm47, %v533, 0
    %537 = vmatprep.subr.bf16.mxu0 0
    %538 = vmatpush1.bf16.msra.mxu0 %v43
    %539 = vmatprep.subr.bf16.mxu0 0
    %540 = vmatpush1.bf16.msra.mxu0 %v44
    %541 = vmatprep.subr.bf16.mxu0 0
    %542 = vmatpush1.bf16.msra.mxu0 0
    %543 = vmatprep.subr.bf16.mxu0 0
    %544 = vmatpush1.bf16.msra.mxu0 0
    %545 = vmatprep.subr.bf16.mxu0 0
    %546 = vmatpush1.bf16.msra.mxu0 0
    %547 = vmatprep.subr.bf16.mxu0 0
    %548 = vmatpush1.bf16.msra.mxu0 0
    %549 = vmatprep.subr.bf16.mxu0 0
    %550 = vmatpush1.bf16.msra.mxu0 0
    %551 = vmatprep.subr.bf16.mxu0 0
    %552 = vmatpush1.bf16.msra.mxu0 0
    %553 = vmatprep.subr.bf16.mxu0 0
    %554 = vmatpush1.bf16.msra.mxu0 0
    %555 = vmatprep.subr.bf16.mxu0 0
    %556 = vmatpush1.bf16.msra.mxu0 0
    %557 = vmatprep.subr.bf16.mxu0 0
    %558 = vmatpush1.bf16.msra.mxu0 0
    %559 = vmatprep.subr.bf16.mxu0 0
    %560 = vmatpush1.bf16.msra.mxu0 0
    %561 = vmatprep.subr.bf16.mxu0 0
    %562 = vmatpush1.bf16.msra.mxu0 0
    %563 = vmatprep.subr.bf16.mxu0 0
    %564 = vmatpush1.bf16.msra.mxu0 0
    %565 = vmatprep.subr.bf16.mxu0 0
    %566 = vmatpush1.bf16.msra.mxu0 0
    %567 = vmatprep.subr.bf16.mxu0 0
    %568 = vmatpush1.bf16.msra.mxu0 0
    %569 = vmatprep.mubr.bf16.mxu0 0
    %570 = vmatmul.mubr.bf16.gmra.mrb[0].mxu0 %v535
    %v571 = vpop.f32.mrb[0].mxu0
    %v572 = vadd.f32 0.0, %v571
    %v573 = vpop.f32.mrb[0].mxu0
    %v574 = vpop.f32.mrb[0].mxu0
    %v575 = vpop.f32.mrb[0].mxu0
    %576 = vdwg.mxu0
    %v577 = vadd.f32 %v529, %v572
    %v578 = vxor.u32 %v577, 2147483648
    %v579 = vmul.f32 %v578, 1.442695
    %v580 = vpow.pop %v579
    %v581 = vadd.f32 %v580, 1.0
    %v582 = vrcp.pop %v581
    %v583 = vmul.f32 1.0, %v582
    %v584 = vtanh.pop %v577
    %v585 = vmul.f32 %v583, %v514
    %587 = vrot.lane.b32.xlu0 %v584, 32
    %v588 = vpop.permute.xlu0 %587
    %v590 = vmul.f32 %v583, %v588
    %592 = vrot.lane.b32.xlu0 %v590, 32
    %v593 = vpop.permute.xlu0 %592
    %v595 = vadd.f32 %v585, %v593
    %v596 = vtanh.pop %v595
    %598 = vrot.lane.b32.xlu0 %v596, 32
    %v599 = vpop.permute.xlu0 %598
    %v601 = vmul.f32 %v583, %v599
    %vm602 = vcmp.eq.s32.totalorder %v31, 6
    %v603 = vlaneseq
    %v604 = vshrl.u32 %v603, 7
    %v605 = vsub.s32 0, %v604
    %v606 = vrot.slane %v601, %v605
    %v607 = vsel %vm602, %v606, %v526
    %s608 = sld [smem:[#allocation4 + $0x7]]
    %s609 = scalar_lea.vmem %s1, %s608
    %v610 = vld [vmem:[%s609] sm:$0x1]
    %v611 = vpack.c.bf16 %v601, %v601
    %613 = vrot.lane.b32.xlu0 %v611, 64
    %v614 = vpop.permute.xlu0 %613
    %v616 = vsel %vm47, %v614, 0
    %618 = vmatprep.subr.bf16.mxu0 0
    %619 = vmatpush1.bf16.msra.mxu0 %v43
    %620 = vmatprep.subr.bf16.mxu0 0
    %621 = vmatpush1.bf16.msra.mxu0 %v44
    %622 = vmatprep.subr.bf16.mxu0 0
    %623 = vmatpush1.bf16.msra.mxu0 0
    %624 = vmatprep.subr.bf16.mxu0 0
    %625 = vmatpush1.bf16.msra.mxu0 0
    %626 = vmatprep.subr.bf16.mxu0 0
    %627 = vmatpush1.bf16.msra.mxu0 0
    %628 = vmatprep.subr.bf16.mxu0 0
    %629 = vmatpush1.bf16.msra.mxu0 0
    %630 = vmatprep.subr.bf16.mxu0 0
    %631 = vmatpush1.bf16.msra.mxu0 0
    %632 = vmatprep.subr.bf16.mxu0 0
    %633 = vmatpush1.bf16.msra.mxu0 0
    %634 = vmatprep.subr.bf16.mxu0 0
    %635 = vmatpush1.bf16.msra.mxu0 0
    %636 = vmatprep.subr.bf16.mxu0 0
    %637 = vmatpush1.bf16.msra.mxu0 0
    %638 = vmatprep.subr.bf16.mxu0 0
    %639 = vmatpush1.bf16.msra.mxu0 0
    %640 = vmatprep.subr.bf16.mxu0 0
    %641 = vmatpush1.bf16.msra.mxu0 0
    %642 = vmatprep.subr.bf16.mxu0 0
    %643 = vmatpush1.bf16.msra.mxu0 0
    %644 = vmatprep.subr.bf16.mxu0 0
    %645 = vmatpush1.bf16.msra.mxu0 0
    %646 = vmatprep.subr.bf16.mxu0 0
    %647 = vmatpush1.bf16.msra.mxu0 0
    %648 = vmatprep.subr.bf16.mxu0 0
    %649 = vmatpush1.bf16.msra.mxu0 0
    %650 = vmatprep.mubr.bf16.mxu0 0
    %651 = vmatmul.mubr.bf16.gmra.mrb[0].mxu0 %v616
    %v652 = vpop.f32.mrb[0].mxu0
    %v653 = vadd.f32 0.0, %v652
    %v654 = vpop.f32.mrb[0].mxu0
    %v655 = vpop.f32.mrb[0].mxu0
    %v656 = vpop.f32.mrb[0].mxu0
    %657 = vdwg.mxu0
    %v658 = vadd.f32 %v610, %v653
    %v659 = vxor.u32 %v658, 2147483648
    %v660 = vmul.f32 %v659, 1.442695
    %v661 = vpow.pop %v660
    %v662 = vadd.f32 %v661, 1.0
    %v663 = vrcp.pop %v662
    %v664 = vmul.f32 1.0, %v663
    %v665 = vtanh.pop %v658
    %v666 = vmul.f32 %v664, %v595
    %668 = vrot.lane.b32.xlu0 %v665, 32
    %v669 = vpop.permute.xlu0 %668
    %v671 = vmul.f32 %v664, %v669
    %673 = vrot.lane.b32.xlu0 %v671, 32
    %v674 = vpop.permute.xlu0 %673
    %v676 = vadd.f32 %v666, %v674
    %v677 = vtanh.pop %v676
    %679 = vrot.lane.b32.xlu0 %v677, 32
    %v680 = vpop.permute.xlu0 %679
    %v682 = vmul.f32 %v664, %v680
    %vm683 = vcmp.eq.s32.totalorder %v31, 7
    %v684 = vlaneseq
    %v685 = vshrl.u32 %v684, 7
    %v686 = vsub.s32 0, %v685
    %v687 = vrot.slane %v682, %v686
    %v688 = vsel %vm683, %v687, %v607
    %690 = vrot.lane.b32.xlu0 %v688, 64
    %v691 = vpop.permute.xlu0 %690
    %693 = vst.msk [vmem:[#allocation2] sm:$0xff] %vm47, %v691
    %v694 = vld [vmem:[#allocation2] sm:$0xff]
    %v695 = vpack.c.bf16 %v694, %v694
    %v696 = vld [vmem:[%s3] sm:$0xf]
    %v697 = vld [vmem:[%s3 + $0x4] sm:$0xf]
    %v698 = vld [vmem:[%s3 + $0x8] sm:$0xf]
    %v699 = vld [vmem:[%s3 + $0xc] sm:$0xf]
    %v700 = vld [vmem:[%s4] sm:$0x1]
    %v702 = vlaneseq
    %v703 = vshrl.u32 %v702, 7
    %v704 = vsub.s32 0, %v703
    %v705 = vrot.slane %v700, %v704
    %v711 = vunpack.c.l.b16 %v696
    %v712 = vunpack.c.l.b16 %v697
    %v713 = vunpack.c.l.b16 %v698
    %v714 = vunpack.c.l.b16 %v699
    %v715 = vpack.c.b16 %v712, %v711
    %v716 = vpack.c.b16 %v714, %v713
    %v720 = vsel %vm47, %v695, 0
    %722 = vmatprep.subr.bf16.mxu0 0
    %723 = vmatpush1.bf16.msra.mxu0 %v715
    %724 = vmatprep.subr.bf16.mxu0 0
    %725 = vmatpush1.bf16.msra.mxu0 %v716
    %726 = vmatprep.subr.bf16.mxu0 0
    %727 = vmatpush1.bf16.msra.mxu0 0
    %728 = vmatprep.subr.bf16.mxu0 0
    %729 = vmatpush1.bf16.msra.mxu0 0
    %730 = vmatprep.subr.bf16.mxu0 0
    %731 = vmatpush1.bf16.msra.mxu0 0
    %732 = vmatprep.subr.bf16.mxu0 0
    %733 = vmatpush1.bf16.msra.mxu0 0
    %734 = vmatprep.subr.bf16.mxu0 0
    %735 = vmatpush1.bf16.msra.mxu0 0
    %736 = vmatprep.subr.bf16.mxu0 0
    %737 = vmatpush1.bf16.msra.mxu0 0
    %738 = vmatprep.subr.bf16.mxu0 0
    %739 = vmatpush1.bf16.msra.mxu0 0
    %740 = vmatprep.subr.bf16.mxu0 0
    %741 = vmatpush1.bf16.msra.mxu0 0
    %742 = vmatprep.subr.bf16.mxu0 0
    %743 = vmatpush1.bf16.msra.mxu0 0
    %744 = vmatprep.subr.bf16.mxu0 0
    %745 = vmatpush1.bf16.msra.mxu0 0
    %746 = vmatprep.subr.bf16.mxu0 0
    %747 = vmatpush1.bf16.msra.mxu0 0
    %748 = vmatprep.subr.bf16.mxu0 0
    %749 = vmatpush1.bf16.msra.mxu0 0
    %750 = vmatprep.subr.bf16.mxu0 0
    %751 = vmatpush1.bf16.msra.mxu0 0
    %752 = vmatprep.subr.bf16.mxu0 0
    %753 = vmatpush1.bf16.msra.mxu0 0
    %754 = vmatprep.mubr.bf16.mxu0 0
    %755 = vmatmul.mubr.bf16.gmra.mrb[0].mxu0 %v720
    %v756 = vpop.f32.mrb[0].mxu0
    %v757 = vadd.f32 %v705, %v756
    %v758 = vpop.f32.mrb[0].mxu0
    %v759 = vpop.f32.mrb[0].mxu0
    %v760 = vpop.f32.mrb[0].mxu0
    %761 = vdwg.mxu0
    %762 = vmax.xlane.f32.xlu0 %v757
    %v763 = vpop.xlane.xlu0 %762
    %v764 = vsub.f32 %v757, %v763
    %v765 = vmul.f32 %v764, 1.442695
    %v766 = vpow.pop %v765
    %767 = vadd.xlane.f32.xlu0 %v766
    %v768 = vpop.xlane.xlu0 %767
    %v769 = vlog2.pop %v768
    %v770 = vmul.f32 %v769, 0.6931472
    %v771 = vsub.f32 %v764, %v770
    %772 = vst [vmem:[#allocation5] sm:$0xff] %v771
    // Predicated region
    $region18: #{lstm_model_forward.1} parent=1 // pred_check
      _
    $region19: #{lstm_model_forward.1} parent=1 // pred_check_branch
      %774 = sbr.rel (0) target = $region21
    $region20: #{lstm_model_forward.1} parent=1 // pred_region
      %s776 = ssub.s32 128, 128
      %777 = vsyncadd [#allocation6], %s776
      %s779 = sshll.u32 [#allocation5], 4
      %s780 = int_to_ptr.vmem [resolvable:$true] %s779
      %782 = dma.vmem_to_hbm [thread:$0]  %s780, 128, %s5, [#allocation6]
    $region21: #{lstm_model_forward.1} parent=1 // pred_fallthru
      _
    // Predicated region
    $region22: #{lstm_model_forward.1} parent=1 // pred_check
      _
    $region23: #{lstm_model_forward.1} parent=1 // pred_check_branch
      %784 = sbr.rel (0) target = $region25
    $region24: #{lstm_model_forward.1} parent=1 // pred_region
      %785 = dma.done [#allocation6], 128
    $region25: #{lstm_model_forward.1} parent=1 // pred_fallthru
      _
    %786 = vsyncpa [#allocation6], 1

</llo_original>
